<compile_context>
chip_gen: v7x
topology: tpu7x:2x2x1
jax: 0.10.0
libtpu: 0.0.40
codegen_flags: <defaults>
</compile_context>

<pallas_src>
import jax
import jax.numpy as jnp
from jax.experimental import pallas as pl
from jax.experimental.pallas import tpu as pltpu


def _round_up(n, m):
    return ((n + m - 1) // m) * m


def _net_kernel(bias_ref, x_ref, w_ref, o_ref):
    # bias_ref : SMEM f32[1]               -- bias scalar
    # x_ref    : VMEM (R, 256), in dtype   -- 128 batch elems / row, the two
    #                                         features interleaved along lanes
    # w_ref    : VMEM (256, 128) f32       -- de-interleave + weight matrix,
    #                                         w_ref[2j+k, j] = weight[0, k]
    # o_ref    : VMEM (R, 128), out dtype
    x = x_ref[...].astype(jnp.float32)

    # One small MXU matmul performs both the lane de-interleave and the
    # 2-feature dot product; MXU is idle otherwise, kernel stays HBM-bound.
    logits = jnp.dot(x, w_ref[...], preferred_element_type=jnp.float32)
    logits = logits + bias_ref[0]

    # sigmoid(z) = 1 / (1 + exp(-z)); exp and the approximate reciprocal both
    # run on the EUP slot.  Very negative z -> exp = inf -> 1/inf = 0 (ok).
    sig = pl.reciprocal(1.0 + jnp.exp(-logits), approx=True)
    o_ref[...] = sig.astype(o_ref.dtype)


def _reference_forward(x, weight, bias):
    """Plain-XLA forward (also the small-batch path)."""
    logits = (x.astype(jnp.float32) @ weight.T.astype(jnp.float32)
              + bias.astype(jnp.float32))
    return jax.nn.sigmoid(logits).astype(x.dtype)


def net_forward(x, weight, bias, *, block_rows=2048, min_kernel_batch=16384,
                force_kernel=False):
    """x: (B, 2), weight: (1, 2), bias: (1,) -> (B, 1) in x.dtype."""
    B, F = x.shape
    assert F == 2, "Net.fc1 expects 2 input features"
    out_dtype = x.dtype

    # Small-batch escape hatch: launch + pad passes dominate below ~1 tile.
    if B < min_kernel_batch and not force_kernel:
        return _reference_forward(x, weight, bias)

    lanes = 128
    rows_needed = pl.cdiv(B, lanes)
    # Clamp the block so short inputs still get >= 2 grid steps (v7x megacore)
    # and padding never runs far past B.  R stays a multiple of 8.
    br = min(block_rows, max(8, _round_up(pl.cdiv(rows_needed, 2), 8)))
    num_tiles = pl.cdiv(rows_needed, br)
    total_rows = num_tiles * br
    b_pad = total_rows * lanes

    # Keep the caller's dtype (no f32 upcast in the wrapper): this op is
    # HBM-bound, bf16 callers move half the input bytes.
    if b_pad != B:
        # TODO(synk): ragged B pays one pad copy; an in-kernel boundary mask
        # would avoid it, but batch sizes divisible by R*128 skip this.
        x = jnp.pad(x, ((0, b_pad - B), (0, 0)))

    # Free, layout-preserving view of the row-major (b_pad, 2) array: row r
    # holds batch elements r*128 .. r*128+127 with features interleaved along
    # the 256 lanes.  No transpose pass over HBM.
    x_slab = x.reshape(total_rows, 2 * lanes)

    # De-interleave + Linear(2,1) as one constant matmul operand:
    #   W[2j + k, j] = weight[0, k]  =>  (x_slab @ W)[r, j] = x0*w0 + x1*w1
    # for batch element r*128 + j.
    w_mat = jnp.kron(jnp.eye(lanes, dtype=jnp.float32),
                     weight.reshape(2, 1).astype(jnp.float32))       # (256, 128)
    bias_arr = bias.reshape(1).astype(jnp.float32)

    in_bytes = b_pad * 2 * jnp.dtype(x.dtype).itemsize
    out_bytes = b_pad * jnp.dtype(out_dtype).itemsize
    cost = pl.CostEstimate(
        flops=4 * b_pad,
        transcendentals=b_pad,
        bytes_accessed=in_bytes + out_bytes + 256 * 128 * 4 + 4,
    )

    out = pl.pallas_call(
        _net_kernel,
        out_shape=jax.ShapeDtypeStruct((total_rows, lanes), out_dtype),
        grid=(num_tiles,),
        in_specs=[
            # Bias: one scalar in SMEM (no padded VMEM tile, no per-step DMA).
            pl.BlockSpec(memory_space=pltpu.MemorySpace.SMEM),
            # x tile: (R, 256) dense slab, ~2 MiB at R=2048/f32.
            pl.BlockSpec((br, 2 * lanes), lambda i: (i, 0)),
            # Constant weight matrix: same block index every step -> fetched once.
            pl.BlockSpec((2 * lanes, lanes), lambda i: (0, 0)),
        ],
        out_specs=pl.BlockSpec((br, lanes), lambda i: (i, 0)),
        compiler_params=pltpu.CompilerParams(
            dimension_semantics=("parallel",)),   # megacore sharding on v7x
        cost_estimate=cost,
    )(bias_arr, x_slab, w_mat)

    # Back to PyTorch's (B, 1) convention (free reshape + slice).
    return out.reshape(b_pad)[:B].reshape(B, 1)


if __name__ == "__main__":
    key = jax.random.PRNGKey(0)
    kx, kw, kb, kx2, kx3 = jax.random.split(key, 5)

    # Deterministic parameter init (shapes from nn.Linear(2, 1)):
    #   weight: (out_features=1, in_features=2), bias: (1,)
    bound = 1.0 / jnp.sqrt(2.0)
    weight = jax.random.uniform(kw, (1, 2), jnp.float32, -bound, bound)
    bias = jax.random.uniform(kb, (1,), jnp.float32, -bound, bound)

    # 1) Tiny batch -> dispatcher takes the small-batch (pure-jnp) path.
    x_small = jax.random.normal(kx, (8, 2), jnp.float32)
    out_small = jax.block_until_ready(net_forward(x_small, weight, bias))
    ref_small = _reference_forward(x_small, weight, bias)
    assert out_small.shape == (8, 1), out_small.shape
    assert jnp.allclose(out_small, ref_small, atol=1e-5, rtol=1e-5)

    # 2) Pallas kernel path: divisible batch, grid of 2 (both v7x TCs busy).
    x_med = jax.random.normal(kx2, (2048, 2), jnp.float32)
    out_med = jax.block_until_ready(
        net_forward(x_med, weight, bias, force_kernel=True))
    ref_med = _reference_forward(x_med, weight, bias)
    assert out_med.shape == (2048, 1), out_med.shape
    assert jnp.allclose(out_med, ref_med, atol=2e-3, rtol=2e-3)

    # 3) Pallas kernel path: ragged batch (exercises pad + slice-back).
    x_rag = jax.random.normal(kx3, (1000, 2), jnp.float32)
    out_rag = jax.block_until_ready(
        net_forward(x_rag, weight, bias, force_kernel=True))
    ref_rag = _reference_forward(x_rag, weight, bias)
    assert out_rag.shape == (1000, 1), out_rag.shape
    assert jnp.allclose(out_rag, ref_rag, atol=2e-3, rtol=2e-3)

    print("KERNEL_OK")
</pallas_src>

<mosaic_0001>
module attributes {stable_mosaic.version = 11 : i64} {
  func.func @_net_kernel(%arg0: i32, %arg1: memref<1xf32, #tpu.memory_space<smem>>, %arg2: memref<8x256xf32, #tpu.memory_space<vmem>>, %arg3: memref<256x128xf32, #tpu.memory_space<vmem>>, %arg4: memref<8x128xf32, #tpu.memory_space<vmem>>) attributes {dimension_semantics = [#tpu.dimension_semantics<parallel>], iteration_bounds = array<i64: 2>, scalar_prefetch = 0 : i64, scratch_operands = 0 : i64, tpu.core_type = #tpu.core_type<tc>, window_params = [{transform_indices = @transform_0, window_bounds = array<i64: 1>}, {transform_indices = @transform_1, window_bounds = array<i64: 8, 256>}, {pipeline_mode = #tpu.pipeline_mode<synchronous>, transform_indices = @transform_2, window_bounds = array<i64: 256, 128>}, {transform_indices = @transform_3, window_bounds = array<i64: 8, 128>}]} {
    %c0 = arith.constant 0 : index
    %c0_0 = arith.constant 0 : index
    %0 = vector.load %arg2[%c0, %c0_0] : memref<8x256xf32, #tpu.memory_space<vmem>>, vector<8x256xf32>
    %c0_1 = arith.constant 0 : index
    %c0_2 = arith.constant 0 : index
    %1 = vector.load %arg3[%c0_1, %c0_2] : memref<256x128xf32, #tpu.memory_space<vmem>>, vector<256x128xf32>
    %cst = arith.constant dense<0.000000e+00> : vector<8x128xf32>
    %2 = tpu.matmul %0, %1, %cst {dimension_numbers = #tpu.dot_dimension_numbers<[1], [0], [0], [1], [0, 0, 1, 1], [], []>} : vector<8x256xf32>, vector<256x128xf32>, vector<8x128xf32> -> vector<8x128xf32>
    %c0_3 = arith.constant 0 : index
    %3 = memref.load %arg1[%c0_3] : memref<1xf32, #tpu.memory_space<smem>>
    %4 = vector.broadcast %3 : f32 to vector<8x128xf32>
    %5 = arith.addf %2, %4 : vector<8x128xf32>
    %cst_4 = arith.constant 0.000000e+00 : f32
    %6 = vector.broadcast %cst_4 : f32 to vector<8x128xf32>
    %7 = arith.subf %6, %5 : vector<8x128xf32>
    %8 = math.exp %7 : vector<8x128xf32>
    %cst_5 = arith.constant 1.000000e+00 : f32
    %9 = vector.broadcast %cst_5 : f32 to vector<8x128xf32>
    %10 = arith.addf %9, %8 : vector<8x128xf32>
    %11 = tpu.reciprocal %10 {approx = true} : vector<8x128xf32> -> vector<8x128xf32>
    %c0_6 = arith.constant 0 : index
    %c0_7 = arith.constant 0 : index
    %12 = vector.load %arg4[%c0_6, %c0_7] : memref<8x128xf32, #tpu.memory_space<vmem>>, vector<8x128xf32>
    tpu.vector_store %arg4[%c0_6, %c0_7], %11 {strides = array<i32>} : memref<8x128xf32, #tpu.memory_space<vmem>>, vector<8x128xf32>,
    return
  }
  func.func @transform_0(%arg0: i32) -> i32 {
    %c0_i32 = arith.constant 0 : i32
    %c0_i32_0 = arith.constant 0 : i32
    return %c0_i32 : i32
  }
  func.func @transform_1(%arg0: i32) -> (i32, i32) {
    %c0_i32 = arith.constant 0 : i32
    %c0_i32_0 = arith.constant 0 : i32
    return %arg0, %c0_i32 : i32, i32
  }
  func.func @transform_2(%arg0: i32) -> (i32, i32) {
    %c0_i32 = arith.constant 0 : i32
    %c0_i32_0 = arith.constant 0 : i32
    %c0_i32_1 = arith.constant 0 : i32
    return %c0_i32, %c0_i32_0 : i32, i32
  }
  func.func @transform_3(%arg0: i32) -> (i32, i32) {
    %c0_i32 = arith.constant 0 : i32
    %c0_i32_0 = arith.constant 0 : i32
    return %arg0, %c0_i32 : i32, i32
  }
}

</mosaic_0001>

<llo_original>
// kernel: tpu_custom_call.1
$region0: #{tpu_custom_call.1}
  #allocation0 [shape = 'u32[]', space=smem, size = 0x4, offset = 0x4, fixed_abs, tag = 'smem constant byte address 0x4 - core index']
  #allocation1 [shape = 'u32[144,128]{1,0:T(1,128)}', space=vmem, size = 0x12000, scoped, tag = 'internal scratch']
  #allocation2 [shape = 'f32[1]{0:T(128)S(6)}', space=smem, size = 0x200, scoped, tag = 'scoped memory for tpu_custom_call.1']
  %s0 = inlined_call_operand.<no memory space> [shape: f32[1], index: 0, kind: input, shape index: {}]
  %s1 = inlined_call_operand.hbm [shape: f32[16,256], index: 1, kind: input, shape index: {}]
  %s2 = inlined_call_operand.hbm [shape: f32[256,128], index: 2, kind: input, shape index: {}]
  %s3 = inlined_call_operand.hbm [shape: f32[16,128], index: 3, kind: output, shape index: {}]
  %s4 = sld [smem:[#allocation0]]
  $region53: #{tpu_custom_call.1} parent=0
    _
  %s6 = ssub.s32 1, %s4
  %s7 = scalar_select 0, %s6, %s4
  %8 = sst [smem:[#allocation2]] %s0
  $region1: #{tpu_custom_call.1} parent=0
    #allocation3 [shape = 'u8[16384]{0}', space=vmem, size = 0x4000, scoped, tag = 'input window, operand 1']
    #allocation4 [shape = 's32[2]{0}', space=sflag, size = 0x8, scoped, tag = 'scoped memory for tpu_custom_call.1']
    #allocation5 [shape = 's32[2]{0}', space=sflag, size = 0x8, scoped, tag = 'scoped memory for tpu_custom_call.1']
    #allocation6 [shape = 'u8[131072]{0}', space=vmem, size = 0x20000, scoped, tag = 'input window, operand 2, single buffered']
    #allocation7 [shape = 's32[1]{0}', space=sflag, size = 0x4, scoped, tag = 'scoped memory for tpu_custom_call.1']
    #allocation8 [shape = 'u8[8192]{0}', space=vmem, size = 0x2000, scoped, tag = 'output window, operand 0']
    %9 = vsyncpa [#allocation4], 0
    %s10 = scalar_lea.sflag [#allocation4], 1
    %11 = vsyncpa %s10, 0
    %12 = vsyncpa [#allocation7], 0
    %13 = vsyncpa [#allocation5], 0
    %s14 = scalar_lea.sflag [#allocation5], 1
    %15 = vsyncpa %s14, 0
    loop: start=0, step=1, limit=4
    $region2: #{tpu_custom_call.1} parent=1 // loop_pre_header
      _
    $region3: #{tpu_custom_call.1} parent=1 // loop_header
      %s17 = sphi 0, %s21
      %p18 = scmp.ge.s32.totalorder %s17, 4
      %s25 = sphi 0, %s25
      %s27 = sphi 0, %s25
      %s28 = sphi 0, %s27
      %s42 = sphi 0, %s28
      %s48 = sphi 0, %s50
      %s51 = sphi 0, %s48
      %s52 = sphi 0, %s51
      %s68 = sphi 0, %s52
      %s72 = sphi 0, %s72
      %s74 = sphi 0, %s72
      %s75 = sphi 0, %s74
      %s89 = sphi 0, %s75
      %s95 = sphi 0, %s97
      %s98 = sphi 0, %s95
      %s99 = sphi 0, %s98
      %s115 = sphi 0, %s99
    $region4: #{tpu_custom_call.1} parent=1 // loop_header_branch
      %20 = sbr.rel (%p18) target = $region8
    $region5: #{tpu_custom_call.1} parent=1 // loop_body
      %s22 = ssub.s32 %s17, 1
      %s23 = ssub.s32 %s17, 2
      %s24 = sadd.s32 %s17, 1
      %s26 = sadd.s32 %s25, 1
      %p29 = scmp.eq.s32.totalorder %s17, 1
      %p30 = scmp.ne.s32.totalorder %s25, %s27
      %p31 = scmp.eq.s32.totalorder %s17, 0
      %p32 = por %p30, %p31
      %p33 = scmp.ne.s32.totalorder %s25, %s27
      %p34 = scmp.eq.s32.totalorder %s22, 1
      %p35 = por %p33, %p34
      %p36 = scmp.ne.s32.totalorder %s27, %s28
      %p37 = scmp.eq.s32.totalorder %s22, 0
      %p38 = por %p36, %p37
      %p39 = scmp.ne.s32.totalorder %s27, %s28
      %p40 = scmp.eq.s32.totalorder %s23, 1
      %p41 = por %p39, %p40
      %p43 = scmp.ne.s32.totalorder %s28, %s42
      %p44 = scmp.eq.s32.totalorder %s23, 0
      %p45 = por %p43, %p44
      %s46 = ssub.s32 %s17, %s24
      %p47 = scmp.eq.s32.totalorder %s46, 0
      %s49 = sadd.s32 %s48, 1
      %s50 = scalar_select %p47, %s48, %s49
      %p53 = pneg %p47
      %p54 = scmp.eq.s32.totalorder %s17, 1
      %p55 = por %p53, %p54
      %p56 = scmp.ne.s32.totalorder %s48, %s51
      %p57 = scmp.eq.s32.totalorder %s17, 0
      %p58 = por %p56, %p57
      %p59 = scmp.ne.s32.totalorder %s48, %s51
      %p60 = scmp.eq.s32.totalorder %s22, 1
      %p61 = por %p59, %p60
      %p62 = scmp.ne.s32.totalorder %s51, %s52
      %p63 = scmp.eq.s32.totalorder %s22, 0
      %p64 = por %p62, %p63
      %p65 = scmp.ne.s32.totalorder %s51, %s52
      %p66 = scmp.eq.s32.totalorder %s23, 1
      %p67 = por %p65, %p66
      %p69 = scmp.ne.s32.totalorder %s52, %s68
      %p70 = scmp.eq.s32.totalorder %s23, 0
      %p71 = por %p69, %p70
      %s73 = sadd.s32 %s72, 1
      %p76 = scmp.eq.s32.totalorder %s17, 1
      %p77 = scmp.ne.s32.totalorder %s72, %s74
      %p78 = scmp.eq.s32.totalorder %s17, 0
      %p79 = por %p77, %p78
      %p80 = scmp.ne.s32.totalorder %s72, %s74
      %p81 = scmp.eq.s32.totalorder %s22, 1
      %p82 = por %p80, %p81
      %p83 = scmp.ne.s32.totalorder %s74, %s75
      %p84 = scmp.eq.s32.totalorder %s22, 0
      %p85 = por %p83, %p84
      %p86 = scmp.ne.s32.totalorder %s74, %s75
      %p87 = scmp.eq.s32.totalorder %s23, 1
      %p88 = por %p86, %p87
      %p90 = scmp.ne.s32.totalorder %s75, %s89
      %p91 = scmp.eq.s32.totalorder %s23, 0
      %p92 = por %p90, %p91
      %s93 = ssub.s32 %s17, %s24
      %p94 = scmp.eq.s32.totalorder %s93, 0
      %s96 = sadd.s32 %s95, 1
      %s97 = scalar_select %p94, %s95, %s96
      %p100 = pneg %p94
      %p101 = scmp.eq.s32.totalorder %s17, 1
      %p102 = por %p100, %p101
      %p103 = scmp.ne.s32.totalorder %s95, %s98
      %p104 = scmp.eq.s32.totalorder %s17, 0
      %p105 = por %p103, %p104
      %p106 = scmp.ne.s32.totalorder %s95, %s98
      %p107 = scmp.eq.s32.totalorder %s22, 1
      %p108 = por %p106, %p107
      %p109 = scmp.ne.s32.totalorder %s98, %s99
      %p110 = scmp.eq.s32.totalorder %s22, 0
      %p111 = por %p109, %p110
      %p112 = scmp.ne.s32.totalorder %s98, %s99
      %p113 = scmp.eq.s32.totalorder %s23, 1
      %p114 = por %p112, %p113
      %p116 = scmp.ne.s32.totalorder %s99, %s115
      %p117 = scmp.eq.s32.totalorder %s23, 0
      %p118 = por %p116, %p117
      %p119 = scmp.le.s32.totalorder 1, %s17
      %p120 = scmp.lt.s32.totalorder %s17, 3
      %p121 = pnand %p119, %p120
      %p122 = pneg %p121
      // Predicated region
      $region9: #{tpu_custom_call.1} parent=5 // pred_check
        _
      $region10: #{tpu_custom_call.1} parent=5 // pred_check_branch
        %124 = sbr.rel (%p121) target = $region12
      $region11: #{tpu_custom_call.1} parent=5 // pred_region
        %s125 = ssub.s32 %s17, 1
        // Predicated region
        $region13: #{tpu_custom_call.1} parent=11 // pred_check
          %p126 = pneg %p38
        $region14: #{tpu_custom_call.1} parent=11 // pred_check_branch
          %128 = sbr.rel (%p126) target = $region16
        $region15: #{tpu_custom_call.1} parent=11 // pred_region
          _
        $region16: #{tpu_custom_call.1} parent=11 // pred_fallthru
          _
        // Predicated region
        $region17: #{tpu_custom_call.1} parent=11 // pred_check
          %p129 = pneg %p85
        $region18: #{tpu_custom_call.1} parent=11 // pred_check_branch
          %131 = sbr.rel (%p129) target = $region20
        $region19: #{tpu_custom_call.1} parent=11 // pred_region
          %s133 = ssub.s32 4096, 4096
          %134 = vsyncadd [#allocation7], %s133
          %s135 = sshll.u32 [#allocation6], 4
          %s136 = int_to_ptr.vmem [resolvable:$true] %s135
          %141 = dma.hbm_to_vmem [thread:$0]  %s2, 4096, %s136, [#allocation7], 128, 128, 8
        $region20: #{tpu_custom_call.1} parent=11 // pred_fallthru
          _
      $region12: #{tpu_custom_call.1} parent=5 // pred_fallthru
        _
      %p142 = scmp.lt.s32.totalorder %s17, 2
      // Predicated region
      $region21: #{tpu_custom_call.1} parent=5 // pred_check
        %p143 = pneg %p142
      $region22: #{tpu_custom_call.1} parent=5 // pred_check_branch
        %145 = sbr.rel (%p143) target = $region24
      $region23: #{tpu_custom_call.1} parent=5 // pred_region
        // Predicated region
        $region25: #{tpu_custom_call.1} parent=23 // pred_check
          %p146 = pneg %p58
        $region26: #{tpu_custom_call.1} parent=23 // pred_check_branch
          %148 = sbr.rel (%p146) target = $region28
        $region27: #{tpu_custom_call.1} parent=23 // pred_region
          %s149 = sand.u32 %s48, 1
          %s150 = scalar_lea.sflag [#allocation4], %s149
          %s151 = sand.u32 %s48, 1
          %s152 = smul.addr %s151, 16
          %s153 = scalar_lea.vmem [#allocation3], %s152
          %s155 = ssub.s32 256, 256
          %156 = vsyncadd %s150, %s155
          %s157 = smul.addr %s17, 2
          %s158 = smul.addr %s157, 128
          %s159 = scalar_lea.hbm %s1, %s158
          %s161 = sshll.u32 %s153, 4
          %s162 = int_to_ptr.vmem [resolvable:$true] %s161
          %164 = dma.hbm_to_vmem [thread:$0]  %s159, 256, %s162, %s150
        $region28: #{tpu_custom_call.1} parent=23 // pred_fallthru
          _
      $region24: #{tpu_custom_call.1} parent=5 // pred_fallthru
        _
      %p165 = scmp.le.s32.totalorder 1, %s17
      %p166 = scmp.lt.s32.totalorder %s17, 3
      %p167 = pnand %p165, %p166
      %p168 = pneg %p167
      // Predicated region
      $region29: #{tpu_custom_call.1} parent=5 // pred_check
        _
      $region30: #{tpu_custom_call.1} parent=5 // pred_check_branch
        %170 = sbr.rel (%p167) target = $region32
      $region31: #{tpu_custom_call.1} parent=5 // pred_region
        %s171 = ssub.s32 %s17, 1
        %s172 = sand.u32 %s51, 1
        %s173 = scalar_lea.sflag [#allocation4], %s172
        %s174 = sand.u32 %s51, 1
        %s175 = smul.addr %s174, 16
        %s176 = scalar_lea.vmem [#allocation3], %s175
        // Predicated region
        $region33: #{tpu_custom_call.1} parent=31 // pred_check
          %p177 = pneg %p64
        $region34: #{tpu_custom_call.1} parent=31 // pred_check_branch
          %179 = sbr.rel (%p177) target = $region36
        $region35: #{tpu_custom_call.1} parent=31 // pred_region
          %180 = dma.done %s173, 256
        $region36: #{tpu_custom_call.1} parent=31 // pred_fallthru
          _
        // Predicated region
        $region37: #{tpu_custom_call.1} parent=31 // pred_check
          %p181 = pneg %p85
        $region38: #{tpu_custom_call.1} parent=31 // pred_check_branch
          %183 = sbr.rel (%p181) target = $region40
        $region39: #{tpu_custom_call.1} parent=31 // pred_region
          %184 = dma.done [#allocation7], 4096
        $region40: #{tpu_custom_call.1} parent=31 // pred_fallthru
          _
        %p185 = pneg %p38
        %p186 = pneg %p35
        %s187 = sand.u32 %s51, 1
        %s188 = scalar_lea.sflag [#allocation4], %s187
        %s189 = sand.u32 %s51, 1
        %s190 = smul.addr %s189, 16
        %s191 = scalar_lea.vmem [#allocation3], %s190
        %p192 = pneg %p64
        %p193 = pneg %p61
        %p194 = pneg %p85
        %p195 = pneg %p82
        %p196 = pneg %p111
        %p197 = pneg %p108
        %s198 = sand.u32 %s98, 1
        %s199 = scalar_lea.sflag [#allocation5], %s198
        %s200 = sand.u32 %s98, 1
        %s201 = smul.addr %s200, 8
        %s202 = scalar_lea.vmem [#allocation8], %s201
        %v203 = vld [vmem:[%s176] sm:$0xff]
        %v204 = vld [vmem:[%s176 + $0x8] sm:$0xff]
        %v205 = vld [vmem:[#allocation6] sm:$0xff]
        %v206 = vld [vmem:[#allocation6 + $0x8] sm:$0xff]
        %v207 = vld [vmem:[#allocation6 + $0x10] sm:$0xff]
        %v208 = vld [vmem:[#allocation6 + $0x18] sm:$0xff]
        %v209 = vld [vmem:[#allocation6 + $0x20] sm:$0xff]
        %v210 = vld [vmem:[#allocation6 + $0x28] sm:$0xff]
        %v211 = vld [vmem:[#allocation6 + $0x30] sm:$0xff]
        %v212 = vld [vmem:[#allocation6 + $0x38] sm:$0xff]
        %v213 = vld [vmem:[#allocation6 + $0x40] sm:$0xff]
        %v214 = vld [vmem:[#allocation6 + $0x48] sm:$0xff]
        %v215 = vld [vmem:[#allocation6 + $0x50] sm:$0xff]
        %v216 = vld [vmem:[#allocation6 + $0x58] sm:$0xff]
        %v217 = vld [vmem:[#allocation6 + $0x60] sm:$0xff]
        %v218 = vld [vmem:[#allocation6 + $0x68] sm:$0xff]
        %v219 = vld [vmem:[#allocation6 + $0x70] sm:$0xff]
        %v220 = vld [vmem:[#allocation6 + $0x78] sm:$0xff]
        %v221 = vld [vmem:[#allocation6 + $0x80] sm:$0xff]
        %v222 = vld [vmem:[#allocation6 + $0x88] sm:$0xff]
        %v223 = vld [vmem:[#allocation6 + $0x90] sm:$0xff]
        %v224 = vld [vmem:[#allocation6 + $0x98] sm:$0xff]
        %v225 = vld [vmem:[#allocation6 + $0xa0] sm:$0xff]
        %v226 = vld [vmem:[#allocation6 + $0xa8] sm:$0xff]
        %v227 = vld [vmem:[#allocation6 + $0xb0] sm:$0xff]
        %v228 = vld [vmem:[#allocation6 + $0xb8] sm:$0xff]
        %v229 = vld [vmem:[#allocation6 + $0xc0] sm:$0xff]
        %v230 = vld [vmem:[#allocation6 + $0xc8] sm:$0xff]
        %v231 = vld [vmem:[#allocation6 + $0xd0] sm:$0xff]
        %v232 = vld [vmem:[#allocation6 + $0xd8] sm:$0xff]
        %v233 = vld [vmem:[#allocation6 + $0xe0] sm:$0xff]
        %v234 = vld [vmem:[#allocation6 + $0xe8] sm:$0xff]
        %v235 = vld [vmem:[#allocation6 + $0xf0] sm:$0xff]
        %v236 = vld [vmem:[#allocation6 + $0xf8] sm:$0xff]
        %s237 = sld [smem:[#allocation2]]
        %v238 = vstv %s237
        %239 = vmatprep.subr.mxu0 0.0
        %240 = vmatpush1.msra.mxu0 %v205
        %241 = vmatprep.subr.mxu0 0.0
        %242 = vmatpush1.msra.mxu0 %v206
        %243 = vmatprep.subr.mxu0 0.0
        %244 = vmatpush1.msra.mxu0 %v207
        %245 = vmatprep.subr.mxu0 0.0
        %246 = vmatpush1.msra.mxu0 %v208
        %247 = vmatprep.subr.mxu0 0.0
        %248 = vmatpush1.msra.mxu0 %v209
        %249 = vmatprep.subr.mxu0 0.0
        %250 = vmatpush1.msra.mxu0 %v210
        %251 = vmatprep.subr.mxu0 0.0
        %252 = vmatpush1.msra.mxu0 %v211
        %253 = vmatprep.subr.mxu0 0.0
        %254 = vmatpush1.msra.mxu0 %v212
        %255 = vmatprep.subr.mxu0 0.0
        %256 = vmatpush1.msra.mxu0 %v213
        %257 = vmatprep.subr.mxu0 0.0
        %258 = vmatpush1.msra.mxu0 %v214
        %259 = vmatprep.subr.mxu0 0.0
        %260 = vmatpush1.msra.mxu0 %v215
        %261 = vmatprep.subr.mxu0 0.0
        %262 = vmatpush1.msra.mxu0 %v216
        %263 = vmatprep.subr.mxu0 0.0
        %264 = vmatpush1.msra.mxu0 %v217
        %265 = vmatprep.subr.mxu0 0.0
        %266 = vmatpush1.msra.mxu0 %v218
        %267 = vmatprep.subr.mxu0 0.0
        %268 = vmatpush1.msra.mxu0 %v219
        %269 = vmatprep.subr.mxu0 0.0
        %270 = vmatpush1.msra.mxu0 %v220
        %271 = vmatprep.subr.mxu0 0.0
        %272 = vmatpush1.msra.mxu0 %v221
        %273 = vmatprep.subr.mxu0 0.0
        %274 = vmatpush1.msra.mxu0 %v222
        %275 = vmatprep.subr.mxu0 0.0
        %276 = vmatpush1.msra.mxu0 %v223
        %277 = vmatprep.subr.mxu0 0.0
        %278 = vmatpush1.msra.mxu0 %v224
        %279 = vmatprep.subr.mxu0 0.0
        %280 = vmatpush1.msra.mxu0 %v225
        %281 = vmatprep.subr.mxu0 0.0
        %282 = vmatpush1.msra.mxu0 %v226
        %283 = vmatprep.subr.mxu0 0.0
        %284 = vmatpush1.msra.mxu0 %v227
        %285 = vmatprep.subr.mxu0 0.0
        %286 = vmatpush1.msra.mxu0 %v228
        %287 = vmatprep.subr.mxu0 0.0
        %288 = vmatpush1.msra.mxu0 %v229
        %289 = vmatprep.subr.mxu0 0.0
        %290 = vmatpush1.msra.mxu0 %v230
        %291 = vmatprep.subr.mxu0 0.0
        %292 = vmatpush1.msra.mxu0 %v231
        %293 = vmatprep.subr.mxu0 0.0
        %294 = vmatpush1.msra.mxu0 %v232
        %295 = vmatprep.subr.mxu0 0.0
        %296 = vmatpush1.msra.mxu0 %v233
        %297 = vmatprep.subr.mxu0 0.0
        %298 = vmatpush1.msra.mxu0 %v234
        %299 = vmatprep.subr.mxu0 0.0
        %300 = vmatpush1.msra.mxu0 %v235
        %301 = vmatprep.subr.mxu0 0.0
        %302 = vmatpush1.msra.mxu0 %v236
        %303 = vmatprep.mubr.f32.mxu0 %v204
        %304 = vmatmul.mubr.f32.gmra.mrb[0].mxu0 %v203
        %v305 = vpop.f32.mrb[0].mxu0
        %v306 = vadd.f32 %v238, %v305
        %v307 = vpop.f32.mrb[0].mxu0
        %308 = vdwg.mxu0
        %v309 = vsub.f32 0.0, %v306
        %v310 = vmul.f32 %v309, 1.442695
        %v311 = vpow.pop %v310
        %v312 = vadd.f32 %v311, 1.0
        %v313 = vrcp.pop %v312
        %314 = vst [vmem:[%s202] sm:$0xff] %v313
        %s315 = sand.u32 %s98, 1
        %s316 = scalar_lea.sflag [#allocation5], %s315
        %s317 = sand.u32 %s98, 1
        %s318 = smul.addr %s317, 8
        %s319 = scalar_lea.vmem [#allocation8], %s318
        // Predicated region
        $region41: #{tpu_custom_call.1} parent=31 // pred_check
          %p320 = pneg %p108
        $region42: #{tpu_custom_call.1} parent=31 // pred_check_branch
          %322 = sbr.rel (%p320) target = $region44
        $region43: #{tpu_custom_call.1} parent=31 // pred_region
          %s324 = ssub.s32 128, 128
          %325 = vsyncadd %s316, %s324
          %s326 = smul.addr %s22, 128
          %s327 = scalar_lea.hbm %s3, %s326
          %s329 = sshll.u32 %s319, 4
          %s330 = int_to_ptr.vmem [resolvable:$true] %s329
          %332 = dma.vmem_to_hbm [thread:$0]  %s330, 128, %s327, %s316
        $region44: #{tpu_custom_call.1} parent=31 // pred_fallthru
          _
      $region32: #{tpu_custom_call.1} parent=5 // pred_fallthru
        _
      %p333 = scmp.le.s32.totalorder 2, %s17
      // Predicated region
      $region45: #{tpu_custom_call.1} parent=5 // pred_check
        %p334 = pneg %p333
      $region46: #{tpu_custom_call.1} parent=5 // pred_check_branch
        %336 = sbr.rel (%p334) target = $region48
      $region47: #{tpu_custom_call.1} parent=5 // pred_region
        %s337 = ssub.s32 %s17, 2
        // Predicated region
        $region49: #{tpu_custom_call.1} parent=47 // pred_check
          %p338 = pneg %p114
        $region50: #{tpu_custom_call.1} parent=47 // pred_check_branch
          %340 = sbr.rel (%p338) target = $region52
        $region51: #{tpu_custom_call.1} parent=47 // pred_region
          %s341 = sand.u32 %s99, 1
          %s342 = scalar_lea.sflag [#allocation5], %s341
          %s343 = sand.u32 %s99, 1
          %s344 = smul.addr %s343, 8
          %s345 = scalar_lea.vmem [#allocation8], %s344
          %346 = dma.done %s342, 128
        $region52: #{tpu_custom_call.1} parent=47 // pred_fallthru
          _
      $region48: #{tpu_custom_call.1} parent=5 // pred_fallthru
        _
    $region6: #{tpu_custom_call.1} parent=1 // loop_footer
      %s21 = sadd.s32 1, %s17
    $region7: #{tpu_custom_call.1} parent=1 // loop_footer_branch
      %16 = sbr.rel target = $region3
    $region8: #{tpu_custom_call.1} parent=1 // loop_exit
      _
    %347 = vsyncpa [#allocation4], 1
    %s348 = scalar_lea.sflag [#allocation4], 1
    %349 = vsyncpa %s348, 1
    %350 = vsyncpa [#allocation7], 1
    %351 = vsyncpa [#allocation5], 1
    %s352 = scalar_lea.sflag [#allocation5], 1
    %353 = vsyncpa %s352, 1

</llo_original>
